<compile_context>
chip_gen: v7x
topology: tpu7x:2x2x1
jax: 0.10.0
libtpu: 0.0.40
codegen_flags: <defaults>
</compile_context>

<pallas_src>
import string
from functools import partial

import jax
import jax.numpy as jnp
from jax.experimental import pallas as pl
from jax.experimental.pallas import tpu as pltpu


# --------------------------- model constants -------------------------------

ALL_LETTERS = string.ascii_letters + ".,;'"
N_LETTERS = len(ALL_LETTERS)        # 56  (input_size)
N_HIDDEN = 128                      # hidden_size
N_CATEGORIES = 18                   # output_size (number of language classes)
N_PACK = 256                        # packed N dim: [hidden(128) | output(18) | pad]
B_PAD = 8                           # sublane-aligned batch (logical batch = 1)


# ----------------------------- Pallas kernel ------------------------------

def rnn_seq_kernel(idx_ref,               # SMEM (T,) int32  : scalar-prefetched char ids
                   w_x_ref,               # VMEM (I, 256) f32 : rows of [W_ih_x | W_io_x | 0]
                   w_h_ref,               # VMEM (H, 256) bf16: [W_ih_h | W_io_h | 0]
                   b_ref,                 # VMEM (1, 256) f32 : [b_ih | b_io | 0]
                   out_ref,               # VMEM (B_PAD, 128) f32 : final log-probs (padded lanes)
                   hid_ref,               # VMEM (B_PAD, H)  f32  : final hidden
                   h_scr,                 # VMEM (B_PAD, H)  f32 scratch: running hidden
                   *, hidden_size, output_size):
    t = pl.program_id(0)
    num_t = pl.num_programs(0)

    @pl.when(t == 0)
    def _():                               # initHidden()
        h_scr[...] = jnp.zeros_like(h_scr)

    # One-hot input  =>  x @ W_x is just a row gather of the packed x-weights.
    c = idx_ref[t]
    x_row = w_x_ref[pl.ds(c, 1), :]        # (1, 256) f32, broadcasts over batch

    # Single fused matmul for both projections: h @ [W_ih_h | W_io_h | 0].
    h_bf16 = h_scr[...].astype(jnp.bfloat16)
    comb = (jnp.dot(h_bf16, w_h_ref[...], preferred_element_type=jnp.float32)
            + x_row + b_ref[...])          # (B_PAD, 256) f32

    new_h = comb[:, :hidden_size]          # hidden' = i2h(combined)
    h_scr[...] = new_h

    # Only the last timestep's output is consumed by the classifier.
    @pl.when(t == num_t - 1)
    def _():
        hid_ref[...] = new_h
        logits = comb[:, hidden_size:]     # (B_PAD, 128); lanes >= O are padding
        lane = jax.lax.broadcasted_iota(jnp.int32, logits.shape, 1)
        valid = lane < output_size
        masked = jnp.where(valid, logits, jnp.float32(-1e30))
        m = jnp.max(masked, axis=1, keepdims=True)
        s = masked - m
        lse = jnp.log(jnp.sum(jnp.exp(s), axis=1, keepdims=True))
        out_ref[...] = jnp.where(valid, s - lse, 0.0)


# ------------------------------- wrapper -----------------------------------

def rnn_forward_sequence(char_idx, params):
    """Run the full character sequence in one fused pallas_call.

    char_idx: (T,) int32 character indices.
    Returns (log_probs (1, O), final_hidden (1, H)) — i.e. the result of
    iterating `output, hidden = rnn(line[t], hidden)` over the whole line.
    """
    T = int(char_idx.shape[0])
    I = params["w_x"].shape[0]
    H = N_HIDDEN
    O = N_CATEGORIES

    kernel = partial(rnn_seq_kernel, hidden_size=H, output_size=O)
    const = lambda t, idx: (0, 0)          # weights / outputs resident across grid

    out, hid = pl.pallas_call(
        kernel,
        out_shape=(
            jax.ShapeDtypeStruct((B_PAD, N_PACK - H), jnp.float32),   # (8, 128)
            jax.ShapeDtypeStruct((B_PAD, H), jnp.float32),            # (8, 128)
        ),
        grid_spec=pltpu.PrefetchScalarGridSpec(
            num_scalar_prefetch=1,
            grid=(T,),
            in_specs=[
                pl.BlockSpec((I, N_PACK), const),
                pl.BlockSpec((H, N_PACK), const),
                pl.BlockSpec((1, N_PACK), const),
            ],
            out_specs=(
                pl.BlockSpec((B_PAD, N_PACK - H), const),
                pl.BlockSpec((B_PAD, H), const),
            ),
            scratch_shapes=[pltpu.VMEM((B_PAD, H), jnp.float32)],
        ),
        compiler_params=pltpu.CompilerParams(
            dimension_semantics=("arbitrary",),     # time axis is a recurrence
            vmem_limit_bytes=32 * 1024 * 1024,
        ),
    )(char_idx, params["w_x"], params["w_h"], params["b"])

    return out[:1, :O], hid[:1, :]


# --------------------------- parameter creation ----------------------------

def init_params(key, input_size, hidden_size, output_size, n_pack=N_PACK):
    """Deterministic init mimicking nn.Linear default (uniform +-1/sqrt(fan_in)).

    PyTorch Linear weight is (out, in); we store the transpose (in, out), pack
    the i2h and i2o projections along N, and split rows into the input slice
    (row-gathered, f32) and hidden slice (MXU operand, bf16).
    """
    k = jax.random.split(key, 4)
    fan_in = input_size + hidden_size
    bound = 1.0 / jnp.sqrt(fan_in)

    w_i2h = jax.random.uniform(k[0], (fan_in, hidden_size), jnp.float32, -bound, bound)
    b_i2h = jax.random.uniform(k[1], (1, hidden_size), jnp.float32, -bound, bound)
    w_i2o = jax.random.uniform(k[2], (fan_in, output_size), jnp.float32, -bound, bound)
    b_i2o = jax.random.uniform(k[3], (1, output_size), jnp.float32, -bound, bound)

    w_cat = jnp.zeros((fan_in, n_pack), jnp.float32)
    w_cat = w_cat.at[:, :hidden_size].set(w_i2h)
    w_cat = w_cat.at[:, hidden_size:hidden_size + output_size].set(w_i2o)

    b_cat = jnp.zeros((1, n_pack), jnp.float32)
    b_cat = b_cat.at[:, :hidden_size].set(b_i2h)
    b_cat = b_cat.at[:, hidden_size:hidden_size + output_size].set(b_i2o)

    return {
        "w_x": w_cat[:input_size, :],                       # (I, 256) f32
        "w_h": w_cat[input_size:, :].astype(jnp.bfloat16),  # (H, 256) bf16
        "b": b_cat,                                         # (1, 256) f32
    }


# ------------------------------ toy "data" ---------------------------------

def letter_to_index(letter):
    return ALL_LETTERS.find(letter)


def line_to_indices(line):
    """Indices instead of one-hot lineToTensor — equivalent under the row-gather."""
    return jnp.array([letter_to_index(c) for c in line], jnp.int32)


# ------------------------- pure-JAX reference ------------------------------

def rnn_reference(char_idx, params, hidden_size, output_size):
    """Same recurrence with the same packed / bf16-quantized weights."""
    w_x = params["w_x"]
    w_h = params["w_h"].astype(jnp.float32)
    b = params["b"]
    h = jnp.zeros((1, hidden_size), jnp.float32)
    comb = None
    for t in range(char_idx.shape[0]):
        x_row = w_x[char_idx[t]][None, :]
        h_q = h.astype(jnp.bfloat16).astype(jnp.float32)
        comb = jnp.dot(h_q, w_h) + x_row + b
        h = comb[:, :hidden_size]
    log_probs = jax.nn.log_softmax(comb[:, hidden_size:hidden_size + output_size], axis=1)
    return log_probs, h


# ---------------------------------- main ------------------------------------

if __name__ == "__main__":
    key = jax.random.PRNGKey(0)
    params = init_params(key, N_LETTERS, N_HIDDEN, N_CATEGORIES)

    # Run the whole name 'Albert' (hidden = initHidden()) in one fused kernel.
    char_idx = line_to_indices("Albert")              # (6,) int32

    log_probs, hidden = rnn_forward_sequence(char_idx, params)
    jax.block_until_ready((log_probs, hidden))

    assert log_probs.shape == (1, N_CATEGORIES)
    assert hidden.shape == (1, N_HIDDEN)
    # log_softmax output must sum (in prob space) to ~1
    assert jnp.allclose(jnp.sum(jnp.exp(log_probs)), 1.0, atol=1e-4)
    assert jnp.all(jnp.isfinite(hidden))

    ref_lp, ref_h = rnn_reference(char_idx, params, N_HIDDEN, N_CATEGORIES)
    assert jnp.allclose(log_probs, ref_lp, atol=2e-3, rtol=2e-3)
    assert jnp.allclose(hidden, ref_h, atol=2e-3, rtol=2e-3)

    print("KERNEL_OK")
</pallas_src>

<mosaic_0001>
module attributes {stable_mosaic.version = 11 : i64} {
  func.func @rnn_seq_kernel(%arg0: i32, %arg1: memref<6xi32, #tpu.memory_space<smem>>, %arg2: memref<56x256xf32, #tpu.memory_space<vmem>>, %arg3: memref<128x256xbf16, #tpu.memory_space<vmem>>, %arg4: memref<1x256xf32, #tpu.memory_space<vmem>>, %arg5: memref<8x128xf32, #tpu.memory_space<vmem>>, %arg6: memref<8x128xf32, #tpu.memory_space<vmem>>, %arg7: memref<8x128xf32, #tpu.memory_space<vmem>>) attributes {dimension_semantics = [#tpu.dimension_semantics<arbitrary>], iteration_bounds = array<i64: 6>, scalar_prefetch = 1 : i64, scratch_operands = 1 : i64, tpu.core_type = #tpu.core_type<tc>, window_params = [{pipeline_mode = #tpu.pipeline_mode<synchronous>, transform_indices = @transform_0, window_bounds = array<i64: 56, 256>}, {pipeline_mode = #tpu.pipeline_mode<synchronous>, transform_indices = @transform_1, window_bounds = array<i64: 128, 256>}, {pipeline_mode = #tpu.pipeline_mode<synchronous>, transform_indices = @transform_2, window_bounds = array<i64: 1, 256>}, {pipeline_mode = #tpu.pipeline_mode<synchronous>, transform_indices = @transform_3, window_bounds = array<i64: 8, 128>}, {pipeline_mode = #tpu.pipeline_mode<synchronous>, transform_indices = @transform_4, window_bounds = array<i64: 8, 128>}]} {
    %c0_i32 = arith.constant 0 : i32
    %0 = arith.cmpi eq, %arg0, %c0_i32 : i32
    %1 = arith.extui %0 : i1 to i32
    %c0_i32_0 = arith.constant 0 : i32
    %2 = arith.cmpi ne, %1, %c0_i32_0 : i32
    scf.if %2 {
      %cst_10 = arith.constant 0.000000e+00 : f32
      %21 = vector.broadcast %cst_10 : f32 to vector<8x128xf32>
      %c0_11 = arith.constant 0 : index
      %c0_12 = arith.constant 0 : index
      %22 = vector.load %arg7[%c0_11, %c0_12] : memref<8x128xf32, #tpu.memory_space<vmem>>, vector<8x128xf32>
      tpu.vector_store %arg7[%c0_11, %c0_12], %21 {strides = array<i32>} : memref<8x128xf32, #tpu.memory_space<vmem>>, vector<8x128xf32>,
    } else {
    }
    %3 = arith.index_cast %arg0 : i32 to index
    %4 = memref.load %arg1[%3] : memref<6xi32, #tpu.memory_space<smem>>
    %5 = arith.index_cast %4 : i32 to index
    %c0 = arith.constant 0 : index
    %6 = vector.load %arg2[%5, %c0] : memref<56x256xf32, #tpu.memory_space<vmem>>, vector<1x256xf32>
    %c0_1 = arith.constant 0 : index
    %c0_2 = arith.constant 0 : index
    %7 = vector.load %arg7[%c0_1, %c0_2] : memref<8x128xf32, #tpu.memory_space<vmem>>, vector<8x128xf32>
    %8 = arith.truncf %7 : vector<8x128xf32> to vector<8x128xbf16>
    %c0_3 = arith.constant 0 : index
    %c0_4 = arith.constant 0 : index
    %9 = vector.load %arg3[%c0_3, %c0_4] : memref<128x256xbf16, #tpu.memory_space<vmem>>, vector<128x256xbf16>
    %cst = arith.constant dense<0.000000e+00> : vector<8x256xf32>
    %10 = tpu.matmul %8, %9, %cst {dimension_numbers = #tpu.dot_dimension_numbers<[1], [0], [0], [1], [0, 0, 1, 1], [], []>} : vector<8x128xbf16>, vector<128x256xbf16>, vector<8x256xf32> -> vector<8x256xf32>
    %11 = vector.broadcast %6 : vector<1x256xf32> to vector<8x256xf32>
    %12 = arith.addf %10, %11 : vector<8x256xf32>
    %c0_5 = arith.constant 0 : index
    %c0_6 = arith.constant 0 : index
    %13 = vector.load %arg4[%c0_5, %c0_6] : memref<1x256xf32, #tpu.memory_space<vmem>>, vector<1x256xf32>
    %14 = vector.broadcast %13 : vector<1x256xf32> to vector<8x256xf32>
    %15 = arith.addf %12, %14 : vector<8x256xf32>
    %16 = vector.extract_strided_slice %15 {offsets = [0, 0], sizes = [8, 128], strides = [1, 1]} : vector<8x256xf32> to vector<8x128xf32>
    %c0_7 = arith.constant 0 : index
    %c0_8 = arith.constant 0 : index
    %17 = vector.load %arg7[%c0_7, %c0_8] : memref<8x128xf32, #tpu.memory_space<vmem>>, vector<8x128xf32>
    tpu.vector_store %arg7[%c0_7, %c0_8], %16 {strides = array<i32>} : memref<8x128xf32, #tpu.memory_space<vmem>>, vector<8x128xf32>,
    %c5_i32 = arith.constant 5 : i32
    %18 = arith.cmpi eq, %arg0, %c5_i32 : i32
    %19 = arith.extui %18 : i1 to i32
    %c0_i32_9 = arith.constant 0 : i32
    %20 = arith.cmpi ne, %19, %c0_i32_9 : i32
    scf.if %20 {
      %c0_10 = arith.constant 0 : index
      %c0_11 = arith.constant 0 : index
      %21 = vector.load %arg6[%c0_10, %c0_11] : memref<8x128xf32, #tpu.memory_space<vmem>>, vector<8x128xf32>
      tpu.vector_store %arg6[%c0_10, %c0_11], %16 {strides = array<i32>} : memref<8x128xf32, #tpu.memory_space<vmem>>, vector<8x128xf32>,
      %22 = vector.extract_strided_slice %15 {offsets = [0, 128], sizes = [8, 128], strides = [1, 1]} : vector<8x256xf32> to vector<8x128xf32>
      %23 = tpu.iota {dimensions = array<i32: 1>} : vector<8x128xi32>
      %c18_i32 = arith.constant 18 : i32
      %24 = vector.broadcast %c18_i32 : i32 to vector<8x128xi32>
      %25 = arith.cmpi slt, %23, %24 : vector<8x128xi32>
      %cst_12 = arith.constant -1.000000e+30 : f32
      %26 = vector.broadcast %cst_12 : f32 to vector<8x128xf32>
      %27 = arith.select %25, %22, %26 : vector<8x128xi1>, vector<8x128xf32>
      %cst_13 = arith.constant dense<0xFF800000> : vector<8xf32>
      %28 = vector.multi_reduction <maximumf>, %27, %cst_13 [1] : vector<8x128xf32> to vector<8xf32>
      %29 = vector.shape_cast %28 : vector<8xf32> to vector<8x1xf32>
      %30 = vector.broadcast %29 : vector<8x1xf32> to vector<8x128xf32>
      %31 = arith.subf %27, %30 : vector<8x128xf32>
      %32 = math.exp %31 : vector<8x128xf32>
      %cst_14 = arith.constant dense<0.000000e+00> : vector<8xf32>
      %33 = vector.multi_reduction <add>, %32, %cst_14 [1] : vector<8x128xf32> to vector<8xf32>
      %34 = vector.shape_cast %33 : vector<8xf32> to vector<8x1xf32>
      %35 = math.log %34 : vector<8x1xf32>
      %36 = vector.broadcast %35 : vector<8x1xf32> to vector<8x128xf32>
      %37 = arith.subf %31, %36 : vector<8x128xf32>
      %cst_15 = arith.constant 0.000000e+00 : f32
      %38 = vector.broadcast %cst_15 : f32 to vector<8x128xf32>
      %39 = arith.select %25, %37, %38 : vector<8x128xi1>, vector<8x128xf32>
      %c0_16 = arith.constant 0 : index
      %c0_17 = arith.constant 0 : index
      %40 = vector.load %arg5[%c0_16, %c0_17] : memref<8x128xf32, #tpu.memory_space<vmem>>, vector<8x128xf32>
      tpu.vector_store %arg5[%c0_16, %c0_17], %39 {strides = array<i32>} : memref<8x128xf32, #tpu.memory_space<vmem>>, vector<8x128xf32>,
    } else {
    }
    return
  }
  func.func @transform_0(%arg0: i32, %arg1: memref<6xi32, #tpu.memory_space<smem>>) -> (i32, i32) {
    %c0_i32 = arith.constant 0 : i32
    %c0_i32_0 = arith.constant 0 : i32
    %c0_i32_1 = arith.constant 0 : i32
    return %c0_i32, %c0_i32_0 : i32, i32
  }
  func.func @transform_1(%arg0: i32, %arg1: memref<6xi32, #tpu.memory_space<smem>>) -> (i32, i32) {
    %c0_i32 = arith.constant 0 : i32
    %c0_i32_0 = arith.constant 0 : i32
    %c0_i32_1 = arith.constant 0 : i32
    return %c0_i32, %c0_i32_0 : i32, i32
  }
  func.func @transform_2(%arg0: i32, %arg1: memref<6xi32, #tpu.memory_space<smem>>) -> (i32, i32) {
    %c0_i32 = arith.constant 0 : i32
    %c0_i32_0 = arith.constant 0 : i32
    %c0_i32_1 = arith.constant 0 : i32
    return %c0_i32, %c0_i32_0 : i32, i32
  }
  func.func @transform_3(%arg0: i32, %arg1: memref<6xi32, #tpu.memory_space<smem>>) -> (i32, i32) {
    %c0_i32 = arith.constant 0 : i32
    %c0_i32_0 = arith.constant 0 : i32
    %c0_i32_1 = arith.constant 0 : i32
    return %c0_i32, %c0_i32_0 : i32, i32
  }
  func.func @transform_4(%arg0: i32, %arg1: memref<6xi32, #tpu.memory_space<smem>>) -> (i32, i32) {
    %c0_i32 = arith.constant 0 : i32
    %c0_i32_0 = arith.constant 0 : i32
    %c0_i32_1 = arith.constant 0 : i32
    return %c0_i32, %c0_i32_0 : i32, i32
  }
}

</mosaic_0001>

<llo_original>
// kernel: tpu_custom_call.1
$region0: #{tpu_custom_call.1}
  #allocation0 [shape = 'u32[]', space=smem, size = 0x4, offset = 0x4, fixed_abs, tag = 'smem constant byte address 0x4 - core index']
  #allocation1 [shape = 'u32[144,128]{1,0:T(1,128)}', space=vmem, size = 0x12000, scoped, tag = 'internal scratch']
  #allocation2 [shape = 'f32[8,128]{1,0:T(8,128)}', space=vmem, size = 0x1000, scoped, tag = 'scratch operand']
  #allocation3 [shape = 's32[1]{0}', space=sflag, size = 0x4, scoped, tag = 'scoped memory for tpu_custom_call.1']
  #allocation4 [shape = 'u8[512]{0}', space=smem, size = 0x200, scoped, tag = 'prefetched SMEM operand 0']
  %s0 = inlined_call_operand.hbm [shape: s32[6], index: 0, kind: input, shape index: {}]
  %s1 = inlined_call_operand.hbm [shape: f32[56,256], index: 1, kind: input, shape index: {}]
  %s2 = inlined_call_operand.hbm [shape: bf16[128,256], index: 2, kind: input, shape index: {}]
  %s3 = inlined_call_operand.vmem [shape: f32[1,256], index: 3, kind: input, shape index: {}]
  %s4 = inlined_call_operand.hbm [shape: f32[8,128], index: 4, kind: output, shape index: {0}]
  %s5 = inlined_call_operand.hbm [shape: f32[8,128], index: 5, kind: output, shape index: {1}]
  %6 = xla_tuple %s4, %s5
  %s7 = sld [smem:[#allocation0]]
  $region69: #{tpu_custom_call.1} parent=0
    _
  %s9 = ssub.s32 1, %s7
  %s10 = scalar_select 0, %s9, %s7
  %12 = dma.hbm_to_smem %s0, 16, [#allocation4], [#allocation3]
  %13 = dma.done [#allocation3], 16
  %14 = sfence
  $region1: #{tpu_custom_call.1} parent=0
    #allocation5 [shape = 'u8[57344]{0}', space=vmem, size = 0xe000, scoped, tag = 'input window, operand 1, single buffered']
    #allocation6 [shape = 's32[2]{0}', space=sflag, size = 0x8, scoped, tag = 'scoped memory for tpu_custom_call.1']
    #allocation7 [shape = 's32[2]{0}', space=sflag, size = 0x8, scoped, tag = 'scoped memory for tpu_custom_call.1']
    #allocation8 [shape = 'u8[65536]{0}', space=vmem, size = 0x10000, scoped, tag = 'input window, operand 2, single buffered']
    #allocation9 [shape = 's32[1]{0}', space=sflag, size = 0x4, scoped, tag = 'scoped memory for tpu_custom_call.1']
    #allocation10 [shape = 'u8[4096]{0}', space=vmem, size = 0x1000, scoped, tag = 'output window, operand 0, single buffered']
    #allocation11 [shape = 'u8[4096]{0}', space=vmem, size = 0x1000, scoped, tag = 'output window, operand 1, single buffered']
    #allocation12 [shape = 's32[1]{0}', space=sflag, size = 0x4, scoped, tag = 'scoped memory for tpu_custom_call.1']
    %15 = vsyncpa [#allocation6], 0
    %16 = vsyncpa [#allocation9], 0
    %17 = vsyncpa [#allocation7], 0
    %18 = vsyncpa [#allocation12], 0
    loop: start=0, step=1, limit=8
    $region2: #{tpu_custom_call.1} parent=1 // loop_pre_header
      _
    $region3: #{tpu_custom_call.1} parent=1 // loop_header
      %s20 = sphi 0, %s24
      %p21 = scmp.ge.s32.totalorder %s20, 8
      %s28 = sphi 0, %s28
      %s30 = sphi 0, %s28
      %s31 = sphi 0, %s30
      %s45 = sphi 0, %s31
      %s49 = sphi 0, %s49
      %s51 = sphi 0, %s49
      %s52 = sphi 0, %s51
      %s66 = sphi 0, %s52
      %s70 = sphi 0, %s70
      %s72 = sphi 0, %s70
      %s73 = sphi 0, %s72
      %s87 = sphi 0, %s73
      %s91 = sphi 0, %s91
      %s93 = sphi 0, %s91
      %s94 = sphi 0, %s93
      %s108 = sphi 0, %s94
      %s112 = sphi 0, %s112
      %s114 = sphi 0, %s112
      %s115 = sphi 0, %s114
      %s129 = sphi 0, %s115
    $region4: #{tpu_custom_call.1} parent=1 // loop_header_branch
      %23 = sbr.rel (%p21) target = $region8
    $region5: #{tpu_custom_call.1} parent=1 // loop_body
      %s25 = ssub.s32 %s20, 1
      %s26 = ssub.s32 %s20, 2
      %s27 = sadd.s32 %s20, 1
      %s29 = sadd.s32 %s28, 1
      %p32 = scmp.eq.s32.totalorder %s20, 5
      %p33 = scmp.ne.s32.totalorder %s28, %s30
      %p34 = scmp.eq.s32.totalorder %s20, 0
      %p35 = por %p33, %p34
      %p36 = scmp.ne.s32.totalorder %s28, %s30
      %p37 = scmp.eq.s32.totalorder %s25, 5
      %p38 = por %p36, %p37
      %p39 = scmp.ne.s32.totalorder %s30, %s31
      %p40 = scmp.eq.s32.totalorder %s25, 0
      %p41 = por %p39, %p40
      %p42 = scmp.ne.s32.totalorder %s30, %s31
      %p43 = scmp.eq.s32.totalorder %s26, 5
      %p44 = por %p42, %p43
      %p46 = scmp.ne.s32.totalorder %s31, %s45
      %p47 = scmp.eq.s32.totalorder %s26, 0
      %p48 = por %p46, %p47
      %s50 = sadd.s32 %s49, 1
      %p53 = scmp.eq.s32.totalorder %s20, 5
      %p54 = scmp.ne.s32.totalorder %s49, %s51
      %p55 = scmp.eq.s32.totalorder %s20, 0
      %p56 = por %p54, %p55
      %p57 = scmp.ne.s32.totalorder %s49, %s51
      %p58 = scmp.eq.s32.totalorder %s25, 5
      %p59 = por %p57, %p58
      %p60 = scmp.ne.s32.totalorder %s51, %s52
      %p61 = scmp.eq.s32.totalorder %s25, 0
      %p62 = por %p60, %p61
      %p63 = scmp.ne.s32.totalorder %s51, %s52
      %p64 = scmp.eq.s32.totalorder %s26, 5
      %p65 = por %p63, %p64
      %p67 = scmp.ne.s32.totalorder %s52, %s66
      %p68 = scmp.eq.s32.totalorder %s26, 0
      %p69 = por %p67, %p68
      %s71 = sadd.s32 %s70, 1
      %p74 = scmp.eq.s32.totalorder %s20, 5
      %p75 = scmp.ne.s32.totalorder %s70, %s72
      %p76 = scmp.eq.s32.totalorder %s20, 0
      %p77 = por %p75, %p76
      %p78 = scmp.ne.s32.totalorder %s70, %s72
      %p79 = scmp.eq.s32.totalorder %s25, 5
      %p80 = por %p78, %p79
      %p81 = scmp.ne.s32.totalorder %s72, %s73
      %p82 = scmp.eq.s32.totalorder %s25, 0
      %p83 = por %p81, %p82
      %p84 = scmp.ne.s32.totalorder %s72, %s73
      %p85 = scmp.eq.s32.totalorder %s26, 5
      %p86 = por %p84, %p85
      %p88 = scmp.ne.s32.totalorder %s73, %s87
      %p89 = scmp.eq.s32.totalorder %s26, 0
      %p90 = por %p88, %p89
      %s92 = sadd.s32 %s91, 1
      %p95 = scmp.eq.s32.totalorder %s20, 5
      %p96 = scmp.ne.s32.totalorder %s91, %s93
      %p97 = scmp.eq.s32.totalorder %s20, 0
      %p98 = por %p96, %p97
      %p99 = scmp.ne.s32.totalorder %s91, %s93
      %p100 = scmp.eq.s32.totalorder %s25, 5
      %p101 = por %p99, %p100
      %p102 = scmp.ne.s32.totalorder %s93, %s94
      %p103 = scmp.eq.s32.totalorder %s25, 0
      %p104 = por %p102, %p103
      %p105 = scmp.ne.s32.totalorder %s93, %s94
      %p106 = scmp.eq.s32.totalorder %s26, 5
      %p107 = por %p105, %p106
      %p109 = scmp.ne.s32.totalorder %s94, %s108
      %p110 = scmp.eq.s32.totalorder %s26, 0
      %p111 = por %p109, %p110
      %s113 = sadd.s32 %s112, 1
      %p116 = scmp.eq.s32.totalorder %s20, 5
      %p117 = scmp.ne.s32.totalorder %s112, %s114
      %p118 = scmp.eq.s32.totalorder %s20, 0
      %p119 = por %p117, %p118
      %p120 = scmp.ne.s32.totalorder %s112, %s114
      %p121 = scmp.eq.s32.totalorder %s25, 5
      %p122 = por %p120, %p121
      %p123 = scmp.ne.s32.totalorder %s114, %s115
      %p124 = scmp.eq.s32.totalorder %s25, 0
      %p125 = por %p123, %p124
      %p126 = scmp.ne.s32.totalorder %s114, %s115
      %p127 = scmp.eq.s32.totalorder %s26, 5
      %p128 = por %p126, %p127
      %p130 = scmp.ne.s32.totalorder %s115, %s129
      %p131 = scmp.eq.s32.totalorder %s26, 0
      %p132 = por %p130, %p131
      %p133 = scmp.le.s32.totalorder 1, %s20
      %p134 = scmp.lt.s32.totalorder %s20, 7
      %p135 = pnand %p133, %p134
      %p136 = pneg %p135
      // Predicated region
      $region9: #{tpu_custom_call.1} parent=5 // pred_check
        _
      $region10: #{tpu_custom_call.1} parent=5 // pred_check_branch
        %138 = sbr.rel (%p135) target = $region12
      $region11: #{tpu_custom_call.1} parent=5 // pred_region
        %s139 = ssub.s32 %s20, 1
        // Predicated region
        $region13: #{tpu_custom_call.1} parent=11 // pred_check
          %p140 = pneg %p41
        $region14: #{tpu_custom_call.1} parent=11 // pred_check_branch
          %142 = sbr.rel (%p140) target = $region16
        $region15: #{tpu_custom_call.1} parent=11 // pred_region
          %s144 = ssub.s32 1792, 1792
          %145 = vsyncadd [#allocation6], %s144
          %s146 = sshll.u32 [#allocation5], 4
          %s147 = int_to_ptr.vmem [resolvable:$true] %s146
          %152 = dma.hbm_to_vmem [thread:$0]  %s1, 1792, %s147, [#allocation6], 256, 256, 16
        $region16: #{tpu_custom_call.1} parent=11 // pred_fallthru
          _
        // Predicated region
        $region17: #{tpu_custom_call.1} parent=11 // pred_check
          %p153 = pneg %p62
        $region18: #{tpu_custom_call.1} parent=11 // pred_check_branch
          %155 = sbr.rel (%p153) target = $region20
        $region19: #{tpu_custom_call.1} parent=11 // pred_region
          %s157 = ssub.s32 2048, 2048
          %158 = vsyncadd [#allocation9], %s157
          %s159 = sshll.u32 [#allocation8], 4
          %s160 = int_to_ptr.vmem [resolvable:$true] %s159
          %165 = dma.hbm_to_vmem [thread:$0]  %s2, 2048, %s160, [#allocation9], 128, 128, 8
        $region20: #{tpu_custom_call.1} parent=11 // pred_fallthru
          _
        // Predicated region
        $region21: #{tpu_custom_call.1} parent=11 // pred_check
          %p166 = pneg %p83
        $region22: #{tpu_custom_call.1} parent=11 // pred_check_branch
          %168 = sbr.rel (%p166) target = $region24
        $region23: #{tpu_custom_call.1} parent=11 // pred_region
          _
        $region24: #{tpu_custom_call.1} parent=11 // pred_fallthru
          _
      $region12: #{tpu_custom_call.1} parent=5 // pred_fallthru
        _
      %p169 = scmp.lt.s32.totalorder %s20, 6
      // Predicated region
      $region25: #{tpu_custom_call.1} parent=5 // pred_check
        %p170 = pneg %p169
      $region26: #{tpu_custom_call.1} parent=5 // pred_check_branch
        %172 = sbr.rel (%p170) target = $region28
      $region27: #{tpu_custom_call.1} parent=5 // pred_region
        _
      $region28: #{tpu_custom_call.1} parent=5 // pred_fallthru
        _
      %p173 = scmp.le.s32.totalorder 1, %s20
      %p174 = scmp.lt.s32.totalorder %s20, 7
      %p175 = pnand %p173, %p174
      %p176 = pneg %p175
      // Predicated region
      $region29: #{tpu_custom_call.1} parent=5 // pred_check
        _
      $region30: #{tpu_custom_call.1} parent=5 // pred_check_branch
        %178 = sbr.rel (%p175) target = $region32
      $region31: #{tpu_custom_call.1} parent=5 // pred_region
        %s179 = ssub.s32 %s20, 1
        // Predicated region
        $region33: #{tpu_custom_call.1} parent=31 // pred_check
          %p180 = pneg %p41
        $region34: #{tpu_custom_call.1} parent=31 // pred_check_branch
          %182 = sbr.rel (%p180) target = $region36
        $region35: #{tpu_custom_call.1} parent=31 // pred_region
          %183 = dma.done [#allocation6], 1792
        $region36: #{tpu_custom_call.1} parent=31 // pred_fallthru
          _
        // Predicated region
        $region37: #{tpu_custom_call.1} parent=31 // pred_check
          %p184 = pneg %p62
        $region38: #{tpu_custom_call.1} parent=31 // pred_check_branch
          %186 = sbr.rel (%p184) target = $region40
        $region39: #{tpu_custom_call.1} parent=31 // pred_region
          %187 = dma.done [#allocation9], 2048
        $region40: #{tpu_custom_call.1} parent=31 // pred_fallthru
          _
        %p188 = pneg %p41
        %p189 = pneg %p38
        %p190 = pneg %p62
        %p191 = pneg %p59
        %p192 = pneg %p83
        %p193 = pneg %p80
        %p194 = pneg %p104
        %p195 = pneg %p101
        %p196 = pneg %p125
        %p197 = pneg %p122
        %p199 = scmp.eq.s32.totalorder %s25, 0
        // Predicated region
        $region41: #{tpu_custom_call.1} parent=31 // pred_check
          %p200 = pneg %p199
        $region42: #{tpu_custom_call.1} parent=31 // pred_check_branch
          %202 = sbr.rel (%p200) target = $region44
        $region43: #{tpu_custom_call.1} parent=31 // pred_region
          %203 = vst [vmem:[#allocation2] sm:$0xff] 0.0
        $region44: #{tpu_custom_call.1} parent=31 // pred_fallthru
          _
        %s204 = sld [smem:[#allocation4 + %s25]]
        %s205 = sshra.s32 %s204, 3
        %s206 = sand.u32 %s204, 7
        %s207 = sshra.s32 %s204, 3
        %s208 = sand.u32 %s204, 7
        %s209 = smul.u32 %s205, 2
        %s210 = smul.u32 %s209, 8
        %s211 = sadd.s32 %s210, %s208
        %s212 = scalar_lea.vmem [#allocation5], %s211
        %v213 = vld [vmem:[%s212] ss:$8 sm:$0x3]
        %v214 = vld [vmem:[#allocation2] sm:$0xff]
        %v215 = vpack.c.bf16 %v214, %v214
        %v216 = vld [vmem:[#allocation8] sm:$0xff]
        %v217 = vld [vmem:[#allocation8 + $0x8] sm:$0xff]
        %v218 = vld [vmem:[#allocation8 + $0x10] sm:$0xff]
        %v219 = vld [vmem:[#allocation8 + $0x18] sm:$0xff]
        %v220 = vld [vmem:[#allocation8 + $0x20] sm:$0xff]
        %v221 = vld [vmem:[#allocation8 + $0x28] sm:$0xff]
        %v222 = vld [vmem:[#allocation8 + $0x30] sm:$0xff]
        %v223 = vld [vmem:[#allocation8 + $0x38] sm:$0xff]
        %v224 = vld [vmem:[#allocation8 + $0x40] sm:$0xff]
        %v225 = vld [vmem:[#allocation8 + $0x48] sm:$0xff]
        %v226 = vld [vmem:[#allocation8 + $0x50] sm:$0xff]
        %v227 = vld [vmem:[#allocation8 + $0x58] sm:$0xff]
        %v228 = vld [vmem:[#allocation8 + $0x60] sm:$0xff]
        %v229 = vld [vmem:[#allocation8 + $0x68] sm:$0xff]
        %v230 = vld [vmem:[#allocation8 + $0x70] sm:$0xff]
        %v231 = vld [vmem:[#allocation8 + $0x78] sm:$0xff]
        %v233 = vlaneseq
        %v234 = vshrl.u32 %v233, 7
        %v235 = vsub.s32 0, %v234
        %v236 = vrot.slane %v213, %v235
        %v237 = vlaneseq
        %v238 = vshrl.u32 %v237, 7
        %v239 = vsub.s32 1, %v238
        %v240 = vrot.slane %v213, %v239
        %v259 = vunpack.c.l.b16 %v216
        %v260 = vunpack.c.h.b16 %v216
        %v261 = vunpack.c.l.b16 %v217
        %v262 = vunpack.c.h.b16 %v217
        %v263 = vunpack.c.l.b16 %v218
        %v264 = vunpack.c.h.b16 %v218
        %v265 = vunpack.c.l.b16 %v219
        %v266 = vunpack.c.h.b16 %v219
        %v267 = vunpack.c.l.b16 %v220
        %v268 = vunpack.c.h.b16 %v220
        %v269 = vunpack.c.l.b16 %v221
        %v270 = vunpack.c.h.b16 %v221
        %v271 = vunpack.c.l.b16 %v222
        %v272 = vunpack.c.h.b16 %v222
        %v273 = vunpack.c.l.b16 %v223
        %v274 = vunpack.c.h.b16 %v223
        %v275 = vunpack.c.l.b16 %v224
        %v276 = vunpack.c.h.b16 %v224
        %v277 = vunpack.c.l.b16 %v225
        %v278 = vunpack.c.h.b16 %v225
        %v279 = vunpack.c.l.b16 %v226
        %v280 = vunpack.c.h.b16 %v226
        %v281 = vunpack.c.l.b16 %v227
        %v282 = vunpack.c.h.b16 %v227
        %v283 = vunpack.c.l.b16 %v228
        %v284 = vunpack.c.h.b16 %v228
        %v285 = vunpack.c.l.b16 %v229
        %v286 = vunpack.c.h.b16 %v229
        %v287 = vunpack.c.l.b16 %v230
        %v288 = vunpack.c.h.b16 %v230
        %v289 = vunpack.c.l.b16 %v231
        %v290 = vunpack.c.h.b16 %v231
        %v291 = vpack.c.b16 %v261, %v259
        %v292 = vpack.c.b16 %v262, %v260
        %v293 = vpack.c.b16 %v265, %v263
        %v294 = vpack.c.b16 %v266, %v264
        %v295 = vpack.c.b16 %v269, %v267
        %v296 = vpack.c.b16 %v270, %v268
        %v297 = vpack.c.b16 %v273, %v271
        %v298 = vpack.c.b16 %v274, %v272
        %v299 = vpack.c.b16 %v277, %v275
        %v300 = vpack.c.b16 %v278, %v276
        %v301 = vpack.c.b16 %v281, %v279
        %v302 = vpack.c.b16 %v282, %v280
        %v303 = vpack.c.b16 %v285, %v283
        %v304 = vpack.c.b16 %v286, %v284
        %v305 = vpack.c.b16 %v289, %v287
        %v306 = vpack.c.b16 %v290, %v288
        %323 = vmatprep.subr.bf16.mxu0 %v292
        %324 = vmatpush1.bf16.msra.mxu0 %v291
        %325 = vmatprep.subr.bf16.mxu0 %v294
        %326 = vmatpush1.bf16.msra.mxu0 %v293
        %327 = vmatprep.subr.bf16.mxu0 %v296
        %328 = vmatpush1.bf16.msra.mxu0 %v295
        %329 = vmatprep.subr.bf16.mxu0 %v298
        %330 = vmatpush1.bf16.msra.mxu0 %v297
        %331 = vmatprep.subr.bf16.mxu0 %v300
        %332 = vmatpush1.bf16.msra.mxu0 %v299
        %333 = vmatprep.subr.bf16.mxu0 %v302
        %334 = vmatpush1.bf16.msra.mxu0 %v301
        %335 = vmatprep.subr.bf16.mxu0 %v304
        %336 = vmatpush1.bf16.msra.mxu0 %v303
        %337 = vmatprep.subr.bf16.mxu0 %v306
        %338 = vmatpush1.bf16.msra.mxu0 %v305
        %339 = vmatprep.subr.bf16.mxu0 0
        %340 = vmatpush1.bf16.msra.mxu0 0
        %341 = vmatprep.subr.bf16.mxu0 0
        %342 = vmatpush1.bf16.msra.mxu0 0
        %343 = vmatprep.subr.bf16.mxu0 0
        %344 = vmatpush1.bf16.msra.mxu0 0
        %345 = vmatprep.subr.bf16.mxu0 0
        %346 = vmatpush1.bf16.msra.mxu0 0
        %347 = vmatprep.subr.bf16.mxu0 0
        %348 = vmatpush1.bf16.msra.mxu0 0
        %349 = vmatprep.subr.bf16.mxu0 0
        %350 = vmatpush1.bf16.msra.mxu0 0
        %351 = vmatprep.subr.bf16.mxu0 0
        %352 = vmatpush1.bf16.msra.mxu0 0
        %353 = vmatprep.subr.bf16.mxu0 0
        %354 = vmatpush1.bf16.msra.mxu0 0
        %355 = vmatprep.mubr.bf16.mxu0 0
        %356 = vmatmul.mubr.bf16.gmra.mrb[0].mxu0 %v215
        %v357 = vpop.f32.mrb[0].mxu0
        %v358 = vadd.f32 %v236, %v357
        %v359 = vpop.f32.mrb[0].mxu0
        %v360 = vadd.f32 %v240, %v359
        %v361 = vpop.f32.mrb[0].mxu0
        %v362 = vpop.f32.mrb[0].mxu0
        %363 = vdwg.mxu0
        %v364 = vld [vmem:[%s3] sm:$0x3]
        %v366 = vlaneseq
        %v367 = vshrl.u32 %v366, 7
        %v368 = vsub.s32 0, %v367
        %v369 = vrot.slane %v364, %v368
        %v370 = vlaneseq
        %v371 = vshrl.u32 %v370, 7
        %v372 = vsub.s32 1, %v371
        %v373 = vrot.slane %v364, %v372
        %v376 = vadd.f32 %v358, %v369
        %v377 = vadd.f32 %v360, %v373
        %378 = vst [vmem:[#allocation2] sm:$0xff] %v376
        %p379 = scmp.eq.s32.totalorder %s25, 5
        // Predicated region
        $region45: #{tpu_custom_call.1} parent=31 // pred_check
          %p380 = pneg %p379
        $region46: #{tpu_custom_call.1} parent=31 // pred_check_branch
          %382 = sbr.rel (%p380) target = $region48
        $region47: #{tpu_custom_call.1} parent=31 // pred_region
          %383 = vst [vmem:[#allocation11] sm:$0xff] %v376
          %v384 = vlaneseq
          %v385 = vand.u32 %v384, 127
          %vm386 = vcmp.lt.s32.totalorder %v385, 18
          %v387 = vsel %vm386, %v377, -1e+30
          %388 = vmax.xlane.f32.xlu0 %v387
          %v389 = vpop.xlane.xlu0 %388
          %v390 = vsub.f32 %v387, %v389
          %v391 = vmul.f32 %v390, 1.442695
          %v392 = vpow.pop %v391
          %393 = vadd.xlane.f32.xlu0 %v392
          %v394 = vpop.xlane.xlu0 %393
          %v395 = vlog2.pop %v394
          %v396 = vmul.f32 %v395, 0.6931472
          %v397 = vsub.f32 %v390, %v396
          %v398 = vsel %vm386, %v397, 0.0
          %399 = vst [vmem:[#allocation10] sm:$0xff] %v398
        $region48: #{tpu_custom_call.1} parent=31 // pred_fallthru
          _
        // Predicated region
        $region49: #{tpu_custom_call.1} parent=31 // pred_check
          %p400 = pneg %p101
        $region50: #{tpu_custom_call.1} parent=31 // pred_check_branch
          %402 = sbr.rel (%p400) target = $region52
        $region51: #{tpu_custom_call.1} parent=31 // pred_region
          %s404 = ssub.s32 128, 128
          %405 = vsyncadd [#allocation7], %s404
          %s407 = sshll.u32 [#allocation10], 4
          %s408 = int_to_ptr.vmem [resolvable:$true] %s407
          %410 = dma.vmem_to_hbm [thread:$0]  %s408, 128, %s4, [#allocation7]
        $region52: #{tpu_custom_call.1} parent=31 // pred_fallthru
          _
        // Predicated region
        $region53: #{tpu_custom_call.1} parent=31 // pred_check
          %p411 = pneg %p122
        $region54: #{tpu_custom_call.1} parent=31 // pred_check_branch
          %413 = sbr.rel (%p411) target = $region56
        $region55: #{tpu_custom_call.1} parent=31 // pred_region
          %s415 = ssub.s32 128, 128
          %416 = vsyncadd [#allocation12], %s415
          %s418 = sshll.u32 [#allocation11], 4
          %s419 = int_to_ptr.vmem [resolvable:$true] %s418
          %421 = dma.vmem_to_hbm [thread:$0]  %s419, 128, %s5, [#allocation12]
        $region56: #{tpu_custom_call.1} parent=31 // pred_fallthru
          _
        // Predicated region
        $region57: #{tpu_custom_call.1} parent=31 // pred_check
          %p422 = pneg %p101
        $region58: #{tpu_custom_call.1} parent=31 // pred_check_branch
          %424 = sbr.rel (%p422) target = $region60
        $region59: #{tpu_custom_call.1} parent=31 // pred_region
          %425 = dma.done [#allocation7], 128
        $region60: #{tpu_custom_call.1} parent=31 // pred_fallthru
          _
        // Predicated region
        $region61: #{tpu_custom_call.1} parent=31 // pred_check
          %p426 = pneg %p122
        $region62: #{tpu_custom_call.1} parent=31 // pred_check_branch
          %428 = sbr.rel (%p426) target = $region64
        $region63: #{tpu_custom_call.1} parent=31 // pred_region
          %429 = dma.done [#allocation12], 128
        $region64: #{tpu_custom_call.1} parent=31 // pred_fallthru
          _
      $region32: #{tpu_custom_call.1} parent=5 // pred_fallthru
        _
      %p430 = scmp.le.s32.totalorder 2, %s20
      // Predicated region
      $region65: #{tpu_custom_call.1} parent=5 // pred_check
        %p431 = pneg %p430
      $region66: #{tpu_custom_call.1} parent=5 // pred_check_branch
        %433 = sbr.rel (%p431) target = $region68
      $region67: #{tpu_custom_call.1} parent=5 // pred_region
        %s434 = ssub.s32 %s20, 2
      $region68: #{tpu_custom_call.1} parent=5 // pred_fallthru
        _
    $region6: #{tpu_custom_call.1} parent=1 // loop_footer
      %s24 = sadd.s32 1, %s20
    $region7: #{tpu_custom_call.1} parent=1 // loop_footer_branch
      %19 = sbr.rel target = $region3
    $region8: #{tpu_custom_call.1} parent=1 // loop_exit
      _
    %435 = vsyncpa [#allocation6], 1
    %s436 = scalar_lea.sflag [#allocation6], 1
    %437 = vsyncpa %s436, 1
    %438 = vsyncpa [#allocation9], 1
    %439 = vsyncpa [#allocation7], 1
    %s440 = scalar_lea.sflag [#allocation7], 1
    %441 = vsyncpa %s440, 1
    %442 = vsyncpa [#allocation12], 1

</llo_original>
